<compile_context>
chip_gen: v6e
topology: v6e:2x2x1
jax: 0.10.0
libtpu: 0.0.40
codegen_flags: <defaults>
</compile_context>

<pallas_src>
import functools

import jax
import jax.numpy as jnp
import numpy as np
from jax.experimental import pallas as pl
from jax.experimental.pallas import tpu as pltpu

LANE = 128
SUBLANE = 8


def _round_up(n, m):
    return ((n + m - 1) // m) * m


def _pad_to(x, shape):
    pads = [(0, t - s) for s, t in zip(x.shape, shape)]
    if all(p == (0, 0) for p in pads):
        return x
    return jnp.pad(x, pads)


def _vmem_config():
    """Per-generation (vmem_limit_bytes, flattened-row target per grid step)."""
    default_cap = 64 * 1024 * 1024
    try:
        cap = int(getattr(pltpu.get_tpu_info(), "vmem_capacity_bytes", default_cap))
    except Exception:
        cap = default_cap
    # Leave headroom for compiler-internal scratch and Pallas double buffers.
    limit = min(cap - 16 * 1024 * 1024, (cap * 7) // 8)
    limit = max(int(limit), 32 * 1024 * 1024)
    rows = 512 if cap >= 96 * 1024 * 1024 else 256   # v5e/v6e: 512, v7x: 256
    return limit, rows


# --------------------------------------------------------------------------
# Kernel 1: value MLP  vh = relu(values @ Wv + bv)   (computed once)
# --------------------------------------------------------------------------
def _value_mlp_kernel(v_ref, wv_ref, bv_ref, vh_ref):
    f32 = jnp.float32
    bb, tk, dv = v_ref.shape
    h = wv_ref.shape[1]
    v2 = v_ref[...].reshape(bb * tk, dv)                       # bf16
    vh = jnp.maximum(
        jnp.dot(v2, wv_ref[...], preferred_element_type=f32) + bv_ref[...],
        0.0)                                                   # (bb*tk, h) f32
    vh_ref[...] = vh.astype(vh_ref.dtype).reshape(bb, tk, h)


# --------------------------------------------------------------------------
# Kernel 2: query MLP + flash attention over key tiles + output MLP
# --------------------------------------------------------------------------
def _attention_kernel(scale,
                      q_ref, vh_ref, bias_ref,
                      wq_ref, bq_ref, wo_ref, bo_ref,
                      out_ref,
                      qh_scr, m_scr, l_scr, acc_scr):
    f32 = jnp.float32
    bf16 = jnp.bfloat16

    bb, tq, dq = q_ref.shape
    _, tk, h = vh_ref.shape
    o = wo_ref.shape[1]

    ki = pl.program_id(2)
    nk = pl.num_programs(2)

    # ---- per (batch-block, q-tile) init: query MLP + softmax state ----
    @pl.when(ki == 0)
    def _():
        q2 = q_ref[...].reshape(bb * tq, dq)                   # bf16
        qh = jnp.maximum(
            jnp.dot(q2, wq_ref[...], preferred_element_type=f32) + bq_ref[...],
            0.0)                                               # (bb*tq, h) f32
        # Fold the 1/sqrt(hidden_dim) scale into the (small) qh block.
        qh_scr[...] = (qh * scale).reshape(bb, tq, h)
        m_scr[...] = jnp.full_like(m_scr, -jnp.inf)
        l_scr[...] = jnp.zeros_like(l_scr)
        acc_scr[...] = jnp.zeros_like(acc_scr)

    vh = vh_ref[...]                                           # (bb, tk, h) bf16

    # ---- scores for this key tile (contract hidden dim of both operands) ----
    s = jnp.einsum('bqh,bkh->bqk', qh_scr[...].astype(bf16), vh,
                   preferred_element_type=f32)                 # (bb, tq, tk)
    # additive mask bias: 0 for valid keys, -1e30 for masked / padded keys
    s = s + bias_ref[...]

    # ---- online softmax update (f32) ----
    m_prev = m_scr[...]
    m_new = jnp.maximum(m_prev, jnp.max(s, axis=-1, keepdims=True))
    alpha = jnp.exp(m_prev - m_new)
    p = jnp.exp(s - m_new)
    l_scr[...] = alpha * l_scr[...] + jnp.sum(p, axis=-1, keepdims=True)
    acc_scr[...] = alpha * acc_scr[...] + jnp.einsum(
        'bqk,bkh->bqh', p.astype(bf16), vh, preferred_element_type=f32)
    m_scr[...] = m_new

    # ---- finalize: normalize + output MLP ----
    @pl.when(ki == nk - 1)
    def _():
        att_out = acc_scr[...] * pl.reciprocal(l_scr[...], approx=True)
        a2 = att_out.astype(bf16).reshape(bb * tq, h)
        out2 = jnp.maximum(
            jnp.dot(a2, wo_ref[...], preferred_element_type=f32) + bo_ref[...],
            0.0)                                               # (bb*tq, o)
        out_ref[...] = out2.reshape(bb, tq, o).astype(out_ref.dtype)


# --------------------------------------------------------------------------
# Wrapper
# --------------------------------------------------------------------------
def attention_forward(queries, values, value_mask, params, hidden_dim):
    """queries: (B, Lq, Dq)  values: (B, Lv, Dv)  value_mask: (B, Lv)."""
    B, Lq, Dq = queries.shape
    _, Lv, Dv = values.shape
    wq, bq, wv, bv, wo, bo = params
    H = wq.shape[1]
    O = wo.shape[1]

    bf16 = jnp.bfloat16
    f32 = jnp.float32

    vmem_limit, row_target = _vmem_config()

    # ---- padded (lane-dense) sizes for weights / hidden / output ----
    H_p = _round_up(H, LANE)
    O_p = _round_up(O, LANE)

    # ---- query tiling: fill ~row_target flattened rows per grid step ----
    Lq8 = _round_up(Lq, SUBLANE)
    TQ = min(row_target, Lq8)
    Lq_p = _round_up(Lq, TQ)
    nq = Lq_p // TQ

    # batch block: maximize MXU fill; no forced megacore split for tiny work
    bb = max(1, min(B, row_target // TQ))
    B_p = _round_up(B, bb)
    nb = B_p // bb

    # ---- key tiling (flash softmax axis) ----
    TK = min(512, _round_up(Lv, LANE))
    Lv_p = _round_up(Lv, TK)
    nk = Lv_p // TK

    # ---- pad + cast inputs (small feature dims Dq/Dv kept natural) ----
    q_p = _pad_to(queries, (B_p, Lq_p, Dq)).astype(bf16)
    v_p = _pad_to(values, (B_p, Lv_p, Dv)).astype(bf16)

    # additive mask bias (bf16); padded batch rows / key positions are masked
    mask_p = _pad_to(value_mask.astype(f32), (B_p, Lv_p))
    bias = jnp.where(mask_p == 0, f32(-1e30), f32(0.0)).astype(bf16)
    bias = bias.reshape(B_p, 1, Lv_p)

    wq_p = _pad_to(wq, (Dq, H_p)).astype(bf16)
    wv_p = _pad_to(wv, (Dv, H_p)).astype(bf16)
    wo_p = _pad_to(wo, (H_p, O_p)).astype(bf16)
    bq_p = _pad_to(bq.reshape(1, H), (1, H_p)).astype(f32)
    bv_p = _pad_to(bv.reshape(1, H), (1, H_p)).astype(f32)
    bo_p = _pad_to(bo.reshape(1, O), (1, O_p)).astype(f32)

    # ---- kernel 1: value MLP, computed once ----
    vh = pl.pallas_call(
        _value_mlp_kernel,
        out_shape=jax.ShapeDtypeStruct((B_p, Lv_p, H_p), bf16),
        grid=(nb, nk),
        in_specs=[
            pl.BlockSpec((bb, TK, Dv), lambda bi, ki: (bi, ki, 0)),   # values
            pl.BlockSpec((Dv, H_p), lambda bi, ki: (0, 0)),           # Wv
            pl.BlockSpec((1, H_p), lambda bi, ki: (0, 0)),            # bv
        ],
        out_specs=pl.BlockSpec((bb, TK, H_p), lambda bi, ki: (bi, ki, 0)),
        compiler_params=pltpu.CompilerParams(
            dimension_semantics=("parallel", "parallel"),
            vmem_limit_bytes=vmem_limit,
        ),
    )(v_p, wv_p, bv_p)

    # ---- kernel 2: flash attention + query / output MLPs ----
    scale = float(1.0 / np.sqrt(hidden_dim))
    kernel = functools.partial(_attention_kernel, scale)

    out_p = pl.pallas_call(
        kernel,
        out_shape=jax.ShapeDtypeStruct((B_p, Lq_p, O_p), f32),
        grid=(nb, nq, nk),
        in_specs=[
            pl.BlockSpec((bb, TQ, Dq), lambda bi, qi, ki: (bi, qi, 0)),   # queries
            pl.BlockSpec((bb, TK, H_p), lambda bi, qi, ki: (bi, ki, 0)),  # vh
            pl.BlockSpec((bb, 1, TK), lambda bi, qi, ki: (bi, 0, ki)),    # mask bias
            pl.BlockSpec((Dq, H_p), lambda bi, qi, ki: (0, 0)),           # Wq
            pl.BlockSpec((1, H_p), lambda bi, qi, ki: (0, 0)),            # bq
            pl.BlockSpec((H_p, O_p), lambda bi, qi, ki: (0, 0)),          # Wo
            pl.BlockSpec((1, O_p), lambda bi, qi, ki: (0, 0)),            # bo
        ],
        out_specs=pl.BlockSpec((bb, TQ, O_p), lambda bi, qi, ki: (bi, qi, 0)),
        scratch_shapes=[
            pltpu.VMEM((bb, TQ, H_p), f32),   # cached (scaled) query MLP
            pltpu.VMEM((bb, TQ, 1), f32),     # m (running max)
            pltpu.VMEM((bb, TQ, 1), f32),     # l (running denom)
            pltpu.VMEM((bb, TQ, H_p), f32),   # acc (running numerator)
        ],
        compiler_params=pltpu.CompilerParams(
            dimension_semantics=("parallel", "parallel", "arbitrary"),
            vmem_limit_bytes=vmem_limit,
        ),
    )(q_p, vh, bias, wq_p, bq_p, wo_p, bo_p)

    return out_p[:B, :Lq, :O]


# --------------------------------------------------------------------------
# Reference / test
# --------------------------------------------------------------------------
def _init_linear(key, fan_in, fan_out):
    # PyTorch nn.Linear default init: U(-1/sqrt(fan_in), 1/sqrt(fan_in))
    kw, kb = jax.random.split(key)
    bound = 1.0 / np.sqrt(fan_in)
    w = jax.random.uniform(kw, (fan_in, fan_out), jnp.float32, -bound, bound)
    b = jax.random.uniform(kb, (fan_out,), jnp.float32, -bound, bound)
    return w, b


def _reference(queries, values, value_mask, params, hidden_dim):
    wq, bq, wv, bv, wo, bo = params
    qh = jax.nn.relu(queries @ wq + bq)
    vh = jax.nn.relu(values @ wv + bv)
    scores = jnp.einsum('bqh,bkh->bqk', qh, vh) / np.sqrt(hidden_dim)
    scores = jnp.where(value_mask[:, None, :] == 0, -jnp.inf, scores)
    att = jax.nn.softmax(scores, axis=-1)
    att_out = jnp.einsum('bqk,bkh->bqh', att, vh)
    return jax.nn.relu(att_out @ wo + bo)


if __name__ == "__main__":
    B, Lq, Lv = 2, 8, 8
    query_dim, value_dim, hidden_dim, out_dim = 16, 24, 32, 8

    key = jax.random.PRNGKey(0)
    kq, kv, km, k1, k2, k3 = jax.random.split(key, 6)

    queries = jax.random.normal(kq, (B, Lq, query_dim), jnp.float32)
    values = jax.random.normal(kv, (B, Lv, value_dim), jnp.float32)
    # mask with some zeros, but at least one valid key position per batch row
    value_mask = (jax.random.uniform(km, (B, Lv)) > 0.3).astype(jnp.int32)
    value_mask = value_mask.at[:, 0].set(1)

    wq, bq = _init_linear(k1, query_dim, hidden_dim)
    wv, bv = _init_linear(k2, value_dim, hidden_dim)
    wo, bo = _init_linear(k3, hidden_dim, out_dim)
    params = (wq, bq, wv, bv, wo, bo)

    out = attention_forward(queries, values, value_mask, params, hidden_dim)
    out = jax.block_until_ready(out)

    ref = _reference(queries, values, value_mask, params, hidden_dim)
    # bf16 MXU operands (f32 accumulation) -> compare with loosened tolerance.
    np.testing.assert_allclose(np.asarray(out), np.asarray(ref),
                               rtol=5e-2, atol=5e-2)

    print("KERNEL_OK")
</pallas_src>

<mosaic_0001>
module attributes {stable_mosaic.version = 11 : i64} {
  func.func @_value_mlp_kernel(%arg0: i32, %arg1: i32, %arg2: memref<2x128x24xbf16, #tpu.memory_space<vmem>>, %arg3: memref<24x128xbf16, #tpu.memory_space<vmem>>, %arg4: memref<1x128xf32, #tpu.memory_space<vmem>>, %arg5: memref<2x128x128xbf16, #tpu.memory_space<vmem>>) attributes {dimension_semantics = [#tpu.dimension_semantics<parallel>, #tpu.dimension_semantics<parallel>], iteration_bounds = array<i64: 1, 1>, scalar_prefetch = 0 : i64, scratch_operands = 0 : i64, tpu.core_type = #tpu.core_type<tc>, window_params = [{transform_indices = @transform_0, window_bounds = array<i64: 2, 128, 24>}, {pipeline_mode = #tpu.pipeline_mode<synchronous>, transform_indices = @transform_1, window_bounds = array<i64: 24, 128>}, {pipeline_mode = #tpu.pipeline_mode<synchronous>, transform_indices = @transform_2, window_bounds = array<i64: 1, 128>}, {transform_indices = @transform_3, window_bounds = array<i64: 2, 128, 128>}]} {
    %c0 = arith.constant 0 : index
    %c0_0 = arith.constant 0 : index
    %c0_1 = arith.constant 0 : index
    %0 = vector.load %arg2[%c0, %c0_0, %c0_1] : memref<2x128x24xbf16, #tpu.memory_space<vmem>>, vector<2x128x24xbf16>
    %1 = vector.shape_cast %0 : vector<2x128x24xbf16> to vector<256x24xbf16>
    %c0_2 = arith.constant 0 : index
    %c0_3 = arith.constant 0 : index
    %2 = vector.load %arg3[%c0_2, %c0_3] : memref<24x128xbf16, #tpu.memory_space<vmem>>, vector<24x128xbf16>
    %cst = arith.constant dense<0.000000e+00> : vector<256x128xf32>
    %3 = tpu.matmul %1, %2, %cst {dimension_numbers = #tpu.dot_dimension_numbers<[1], [0], [0], [1], [0, 0, 1, 1], [], []>} : vector<256x24xbf16>, vector<24x128xbf16>, vector<256x128xf32> -> vector<256x128xf32>
    %c0_4 = arith.constant 0 : index
    %c0_5 = arith.constant 0 : index
    %4 = vector.load %arg4[%c0_4, %c0_5] : memref<1x128xf32, #tpu.memory_space<vmem>>, vector<1x128xf32>
    %5 = vector.broadcast %4 : vector<1x128xf32> to vector<256x128xf32>
    %6 = arith.addf %3, %5 : vector<256x128xf32>
    %cst_6 = arith.constant 0.000000e+00 : f32
    %7 = vector.broadcast %cst_6 : f32 to vector<256x128xf32>
    %8 = arith.maximumf %6, %7 : vector<256x128xf32>
    %9 = arith.truncf %8 : vector<256x128xf32> to vector<256x128xbf16>
    %10 = vector.shape_cast %9 : vector<256x128xbf16> to vector<2x128x128xbf16>
    %c0_7 = arith.constant 0 : index
    %c0_8 = arith.constant 0 : index
    %c0_9 = arith.constant 0 : index
    %11 = vector.load %arg5[%c0_7, %c0_8, %c0_9] : memref<2x128x128xbf16, #tpu.memory_space<vmem>>, vector<2x128x128xbf16>
    tpu.vector_store %arg5[%c0_7, %c0_8, %c0_9], %10 {strides = array<i32>} : memref<2x128x128xbf16, #tpu.memory_space<vmem>>, vector<2x128x128xbf16>,
    return
  }
  func.func @transform_0(%arg0: i32, %arg1: i32) -> (i32, i32, i32) {
    %c0_i32 = arith.constant 0 : i32
    %c0_i32_0 = arith.constant 0 : i32
    return %arg0, %arg1, %c0_i32 : i32, i32, i32
  }
  func.func @transform_1(%arg0: i32, %arg1: i32) -> (i32, i32) {
    %c0_i32 = arith.constant 0 : i32
    %c0_i32_0 = arith.constant 0 : i32
    %c0_i32_1 = arith.constant 0 : i32
    return %c0_i32, %c0_i32_0 : i32, i32
  }
  func.func @transform_2(%arg0: i32, %arg1: i32) -> (i32, i32) {
    %c0_i32 = arith.constant 0 : i32
    %c0_i32_0 = arith.constant 0 : i32
    %c0_i32_1 = arith.constant 0 : i32
    return %c0_i32, %c0_i32_0 : i32, i32
  }
  func.func @transform_3(%arg0: i32, %arg1: i32) -> (i32, i32, i32) {
    %c0_i32 = arith.constant 0 : i32
    %c0_i32_0 = arith.constant 0 : i32
    return %arg0, %arg1, %c0_i32 : i32, i32, i32
  }
}

</mosaic_0001>

<llo_original>
// kernel: tpu_custom_call.1
$region0: #{tpu_custom_call.1}
  #allocation0 [shape = 'u32[]', space=smem, size = 0x4, offset = 0x4, fixed_abs, tag = 'smem constant byte address 0x4 - core index']
  #allocation1 [shape = 'u32[144,128]{1,0:T(1,128)}', space=vmem, size = 0x12000, scoped, tag = 'internal scratch']
  %s0 = inlined_call_operand.vmem [shape: bf16[2,128,24], index: 0, kind: input, shape index: {}]
  %s1 = inlined_call_operand.vmem [shape: bf16[24,128], index: 1, kind: input, shape index: {}]
  %s2 = inlined_call_operand.vmem [shape: f32[1,128], index: 2, kind: input, shape index: {}]
  %s3 = inlined_call_operand.hbm [shape: bf16[2,128,128], index: 3, kind: output, shape index: {}]
  %s4 = sld [smem:[#allocation0]]
  $region22: #{tpu_custom_call.1} parent=0
    _
  %s6 = ssub.s32 1, %s4
  %s7 = scalar_select 0, %s6, %s4
  $region1: #{tpu_custom_call.1} parent=0
    #allocation2 [shape = 'u8[65536]{0}', space=vmem, size = 0x10000, scoped, tag = 'output window, operand 0, single buffered']
    #allocation3 [shape = 's32[1]{0}', space=sflag, size = 0x4, scoped, tag = 'scoped memory for tpu_custom_call.1']
    %8 = vsyncpa [#allocation3], 0
    // Predicated region
    $region2: #{tpu_custom_call.1} parent=1 // pred_check
      _
    $region3: #{tpu_custom_call.1} parent=1 // pred_check_branch
      %10 = sbr.rel (0) target = $region5
    $region4: #{tpu_custom_call.1} parent=1 // pred_region
      _
    $region5: #{tpu_custom_call.1} parent=1 // pred_fallthru
      _
    // Predicated region
    $region6: #{tpu_custom_call.1} parent=1 // pred_check
      _
    $region7: #{tpu_custom_call.1} parent=1 // pred_check_branch
      %12 = sbr.rel (0) target = $region9
    $region8: #{tpu_custom_call.1} parent=1 // pred_region
      _
    $region9: #{tpu_custom_call.1} parent=1 // pred_fallthru
      _
    // Predicated region
    $region10: #{tpu_custom_call.1} parent=1 // pred_check
      _
    $region11: #{tpu_custom_call.1} parent=1 // pred_check_branch
      %14 = sbr.rel (0) target = $region13
    $region12: #{tpu_custom_call.1} parent=1 // pred_region
      _
    $region13: #{tpu_custom_call.1} parent=1 // pred_fallthru
      _
    %v16 = vld [vmem:[%s0] sm:$0xf]
    %v17 = vld [vmem:[%s0 + $0x4] sm:$0xf]
    %v18 = vld [vmem:[%s0 + $0x8] sm:$0xf]
    %v19 = vld [vmem:[%s0 + $0xc] sm:$0xf]
    %v20 = vld [vmem:[%s0 + $0x10] sm:$0xf]
    %v21 = vld [vmem:[%s0 + $0x14] sm:$0xf]
    %v22 = vld [vmem:[%s0 + $0x18] sm:$0xf]
    %v23 = vld [vmem:[%s0 + $0x1c] sm:$0xf]
    %v24 = vld [vmem:[%s0 + $0x20] sm:$0xf]
    %v25 = vld [vmem:[%s0 + $0x24] sm:$0xf]
    %v26 = vld [vmem:[%s0 + $0x28] sm:$0xf]
    %v27 = vld [vmem:[%s0 + $0x2c] sm:$0xf]
    %v28 = vld [vmem:[%s0 + $0x30] sm:$0xf]
    %v29 = vld [vmem:[%s0 + $0x34] sm:$0xf]
    %v30 = vld [vmem:[%s0 + $0x38] sm:$0xf]
    %v31 = vld [vmem:[%s0 + $0x3c] sm:$0xf]
    %v32 = vld [vmem:[%s0 + $0x40] sm:$0xf]
    %v33 = vld [vmem:[%s0 + $0x44] sm:$0xf]
    %v34 = vld [vmem:[%s0 + $0x48] sm:$0xf]
    %v35 = vld [vmem:[%s0 + $0x4c] sm:$0xf]
    %v36 = vld [vmem:[%s0 + $0x50] sm:$0xf]
    %v37 = vld [vmem:[%s0 + $0x54] sm:$0xf]
    %v38 = vld [vmem:[%s0 + $0x58] sm:$0xf]
    %v39 = vld [vmem:[%s0 + $0x5c] sm:$0xf]
    %v40 = vld [vmem:[%s0 + $0x60] sm:$0xf]
    %v41 = vld [vmem:[%s0 + $0x64] sm:$0xf]
    %v42 = vld [vmem:[%s0 + $0x68] sm:$0xf]
    %v43 = vld [vmem:[%s0 + $0x6c] sm:$0xf]
    %v44 = vld [vmem:[%s0 + $0x70] sm:$0xf]
    %v45 = vld [vmem:[%s0 + $0x74] sm:$0xf]
    %v46 = vld [vmem:[%s0 + $0x78] sm:$0xf]
    %v47 = vld [vmem:[%s0 + $0x7c] sm:$0xf]
    %v48 = vld [vmem:[%s1] sm:$0xf]
    %v49 = vld [vmem:[%s1 + $0x4] sm:$0xf]
    %v50 = vld [vmem:[%s1 + $0x8] sm:$0xf]
    %v51 = vld [vmem:[%s2] sm:$0x1]
    %v53 = vlaneseq
    %v54 = vshrl.u32 %v53, 7
    %v55 = vsub.s32 0, %v54
    %v56 = vrot.slane %v51, %v55
    %v90 = vunpack.c.l.b16 %v16
    %v91 = vunpack.c.l.b16 %v17
    %v92 = vunpack.c.l.b16 %v18
    %v93 = vunpack.c.l.b16 %v19
    %v94 = vunpack.c.l.b16 %v20
    %v95 = vunpack.c.l.b16 %v21
    %v96 = vunpack.c.l.b16 %v22
    %v97 = vunpack.c.l.b16 %v23
    %v98 = vunpack.c.l.b16 %v24
    %v99 = vunpack.c.l.b16 %v25
    %v100 = vunpack.c.l.b16 %v26
    %v101 = vunpack.c.l.b16 %v27
    %v102 = vunpack.c.l.b16 %v28
    %v103 = vunpack.c.l.b16 %v29
    %v104 = vunpack.c.l.b16 %v30
    %v105 = vunpack.c.l.b16 %v31
    %v106 = vunpack.c.l.b16 %v32
    %v107 = vunpack.c.l.b16 %v33
    %v108 = vunpack.c.l.b16 %v34
    %v109 = vunpack.c.l.b16 %v35
    %v110 = vunpack.c.l.b16 %v36
    %v111 = vunpack.c.l.b16 %v37
    %v112 = vunpack.c.l.b16 %v38
    %v113 = vunpack.c.l.b16 %v39
    %v114 = vunpack.c.l.b16 %v40
    %v115 = vunpack.c.l.b16 %v41
    %v116 = vunpack.c.l.b16 %v42
    %v117 = vunpack.c.l.b16 %v43
    %v118 = vunpack.c.l.b16 %v44
    %v119 = vunpack.c.l.b16 %v45
    %v120 = vunpack.c.l.b16 %v46
    %v121 = vunpack.c.l.b16 %v47
    %v122 = vpack.c.b16 %v91, %v90
    %v123 = vpack.c.b16 %v93, %v92
    %v124 = vpack.c.b16 %v95, %v94
    %v125 = vpack.c.b16 %v97, %v96
    %v126 = vpack.c.b16 %v99, %v98
    %v127 = vpack.c.b16 %v101, %v100
    %v128 = vpack.c.b16 %v103, %v102
    %v129 = vpack.c.b16 %v105, %v104
    %v130 = vpack.c.b16 %v107, %v106
    %v131 = vpack.c.b16 %v109, %v108
    %v132 = vpack.c.b16 %v111, %v110
    %v133 = vpack.c.b16 %v113, %v112
    %v134 = vpack.c.b16 %v115, %v114
    %v135 = vpack.c.b16 %v117, %v116
    %v136 = vpack.c.b16 %v119, %v118
    %v137 = vpack.c.b16 %v121, %v120
    %v141 = vunpack.c.l.b16 %v48
    %v142 = vunpack.c.l.b16 %v49
    %v143 = vunpack.c.l.b16 %v50
    %v144 = vpack.c.b16 %v142, %v141
    %v145 = vpack.c.b16 %v143, %v143
    %vm147 = vcmask 195584
    %v149 = vsel %vm147, %v122, 0
    %v152 = vsel %vm147, %v123, 0
    %v155 = vsel %vm147, %v124, 0
    %v158 = vsel %vm147, %v125, 0
    %v161 = vsel %vm147, %v126, 0
    %v164 = vsel %vm147, %v127, 0
    %v167 = vsel %vm147, %v128, 0
    %v170 = vsel %vm147, %v129, 0
    %v173 = vsel %vm147, %v130, 0
    %v176 = vsel %vm147, %v131, 0
    %v179 = vsel %vm147, %v132, 0
    %v182 = vsel %vm147, %v133, 0
    %v185 = vsel %vm147, %v134, 0
    %v188 = vsel %vm147, %v135, 0
    %v191 = vsel %vm147, %v136, 0
    %v194 = vsel %vm147, %v137, 0
    %vm196 = vcmask 1043456
    %v198 = vsel %vm196, %v145, 0
    %200 = vmatprep.subr.bf16.mxu0 0
    %201 = vmatpush1.bf16.msra.mxu0 0
    %202 = vmatprep.subr.bf16.mxu0 0
    %203 = vmatpush1.bf16.msra.mxu0 0
    %204 = vmatprep.subr.bf16.mxu0 0
    %205 = vmatpush1.bf16.msra.mxu0 0
    %206 = vmatprep.subr.bf16.mxu0 0
    %207 = vmatpush1.bf16.msra.mxu0 0
    %208 = vmatprep.subr.bf16.mxu0 0
    %209 = vmatpush1.bf16.msra.mxu0 0
    %210 = vmatprep.subr.bf16.mxu0 0
    %211 = vmatpush1.bf16.msra.mxu0 0
    %212 = vmatprep.subr.bf16.mxu0 0
    %213 = vmatpush1.bf16.msra.mxu0 %v198
    %214 = vmatprep.subr.bf16.mxu0 0
    %215 = vmatpush1.bf16.msra.mxu0 %v144
    %216 = vmatprep.subr.bf16.mxu0 0
    %217 = vmatpush2.bf16.msra.mxu0 0
    %218 = vmatprep.subr.bf16.mxu0 0
    %219 = vmatpush2.bf16.msra.mxu0 0
    %220 = vmatprep.subr.bf16.mxu0 0
    %221 = vmatpush2.bf16.msra.mxu0 0
    %222 = vmatprep.subr.bf16.mxu0 0
    %223 = vmatpush2.bf16.msra.mxu0 0
    %224 = vmatprep.subr.bf16.mxu0 0
    %225 = vmatpush2.bf16.msra.mxu0 0
    %226 = vmatprep.subr.bf16.mxu0 0
    %227 = vmatpush2.bf16.msra.mxu0 0
    %228 = vmatprep.subr.bf16.mxu0 0
    %229 = vmatpush2.bf16.msra.mxu0 0
    %230 = vmatprep.subr.bf16.mxu0 0
    %231 = vmatpush2.bf16.msra.mxu0 0
    %232 = vmatprep.mubr.bf16.mxu0 0
    %233 = vmatmul.mubr.bf16.gmra.mxu0 %v149
    %v234 = vpop.f32.mrf.mxu0
    %v235 = vadd.f32 %v56, %v234
    %v236 = vpop.f32.mrf.mxu0
    %v237 = vpop.f32.mrf.mxu0
    %v238 = vadd.f32 %v56, %v237
    %v239 = vpop.f32.mrf.mxu0
    %240 = vmatprep.mubr.bf16.mxu0 0
    %241 = vmatmul.mubr.bf16.gmra.mxu0 %v152
    %v242 = vpop.f32.mrf.mxu0
    %v243 = vadd.f32 %v56, %v242
    %v244 = vpop.f32.mrf.mxu0
    %v245 = vpop.f32.mrf.mxu0
    %v246 = vadd.f32 %v56, %v245
    %v247 = vpop.f32.mrf.mxu0
    %248 = vmatprep.mubr.bf16.mxu0 0
    %249 = vmatmul.mubr.bf16.gmra.mxu0 %v155
    %v250 = vpop.f32.mrf.mxu0
    %v251 = vadd.f32 %v56, %v250
    %v252 = vpop.f32.mrf.mxu0
    %v253 = vpop.f32.mrf.mxu0
    %v254 = vadd.f32 %v56, %v253
    %v255 = vpop.f32.mrf.mxu0
    %256 = vmatprep.mubr.bf16.mxu0 0
    %257 = vmatmul.mubr.bf16.gmra.mxu0 %v158
    %v258 = vpop.f32.mrf.mxu0
    %v259 = vadd.f32 %v56, %v258
    %v260 = vpop.f32.mrf.mxu0
    %v261 = vpop.f32.mrf.mxu0
    %v262 = vadd.f32 %v56, %v261
    %v263 = vpop.f32.mrf.mxu0
    %264 = vmatprep.mubr.bf16.mxu0 0
    %265 = vmatmul.mubr.bf16.gmra.mxu0 %v161
    %v266 = vpop.f32.mrf.mxu0
    %v267 = vadd.f32 %v56, %v266
    %v268 = vpop.f32.mrf.mxu0
    %v269 = vpop.f32.mrf.mxu0
    %v270 = vadd.f32 %v56, %v269
    %v271 = vpop.f32.mrf.mxu0
    %272 = vmatprep.mubr.bf16.mxu0 0
    %273 = vmatmul.mubr.bf16.gmra.mxu0 %v164
    %v274 = vpop.f32.mrf.mxu0
    %v275 = vadd.f32 %v56, %v274
    %v276 = vpop.f32.mrf.mxu0
    %v277 = vpop.f32.mrf.mxu0
    %v278 = vadd.f32 %v56, %v277
    %v279 = vpop.f32.mrf.mxu0
    %280 = vmatprep.mubr.bf16.mxu0 0
    %281 = vmatmul.mubr.bf16.gmra.mxu0 %v167
    %v282 = vpop.f32.mrf.mxu0
    %v283 = vadd.f32 %v56, %v282
    %v284 = vpop.f32.mrf.mxu0
    %v285 = vpop.f32.mrf.mxu0
    %v286 = vadd.f32 %v56, %v285
    %v287 = vpop.f32.mrf.mxu0
    %288 = vmatprep.mubr.bf16.mxu0 0
    %289 = vmatmul.mubr.bf16.gmra.mxu0 %v170
    %v290 = vpop.f32.mrf.mxu0
    %v291 = vadd.f32 %v56, %v290
    %v292 = vpop.f32.mrf.mxu0
    %v293 = vpop.f32.mrf.mxu0
    %v294 = vadd.f32 %v56, %v293
    %v295 = vpop.f32.mrf.mxu0
    %296 = vmatprep.mubr.bf16.mxu0 0
    %297 = vmatmul.mubr.bf16.gmra.mxu0 %v173
    %v298 = vpop.f32.mrf.mxu0
    %v299 = vadd.f32 %v56, %v298
    %v300 = vpop.f32.mrf.mxu0
    %v301 = vpop.f32.mrf.mxu0
    %v302 = vadd.f32 %v56, %v301
    %v303 = vpop.f32.mrf.mxu0
    %304 = vmatprep.mubr.bf16.mxu0 0
    %305 = vmatmul.mubr.bf16.gmra.mxu0 %v176
    %v306 = vpop.f32.mrf.mxu0
    %v307 = vadd.f32 %v56, %v306
    %v308 = vpop.f32.mrf.mxu0
    %v309 = vpop.f32.mrf.mxu0
    %v310 = vadd.f32 %v56, %v309
    %v311 = vpop.f32.mrf.mxu0
    %312 = vmatprep.mubr.bf16.mxu0 0
    %313 = vmatmul.mubr.bf16.gmra.mxu0 %v179
    %v314 = vpop.f32.mrf.mxu0
    %v315 = vadd.f32 %v56, %v314
    %v316 = vpop.f32.mrf.mxu0
    %v317 = vpop.f32.mrf.mxu0
    %v318 = vadd.f32 %v56, %v317
    %v319 = vpop.f32.mrf.mxu0
    %320 = vmatprep.mubr.bf16.mxu0 0
    %321 = vmatmul.mubr.bf16.gmra.mxu0 %v182
    %v322 = vpop.f32.mrf.mxu0
    %v323 = vadd.f32 %v56, %v322
    %v324 = vpop.f32.mrf.mxu0
    %v325 = vpop.f32.mrf.mxu0
    %v326 = vadd.f32 %v56, %v325
    %v327 = vpop.f32.mrf.mxu0
    %328 = vmatprep.mubr.bf16.mxu0 0
    %329 = vmatmul.mubr.bf16.gmra.mxu0 %v185
    %v330 = vpop.f32.mrf.mxu0
    %v331 = vadd.f32 %v56, %v330
    %v332 = vpop.f32.mrf.mxu0
    %v333 = vpop.f32.mrf.mxu0
    %v334 = vadd.f32 %v56, %v333
    %v335 = vpop.f32.mrf.mxu0
    %336 = vmatprep.mubr.bf16.mxu0 0
    %337 = vmatmul.mubr.bf16.gmra.mxu0 %v188
    %v338 = vpop.f32.mrf.mxu0
    %v339 = vadd.f32 %v56, %v338
    %v340 = vpop.f32.mrf.mxu0
    %v341 = vpop.f32.mrf.mxu0
    %v342 = vadd.f32 %v56, %v341
    %v343 = vpop.f32.mrf.mxu0
    %344 = vmatprep.mubr.bf16.mxu0 0
    %345 = vmatmul.mubr.bf16.gmra.mxu0 %v191
    %v346 = vpop.f32.mrf.mxu0
    %v347 = vadd.f32 %v56, %v346
    %v348 = vpop.f32.mrf.mxu0
    %v349 = vpop.f32.mrf.mxu0
    %v350 = vadd.f32 %v56, %v349
    %v351 = vpop.f32.mrf.mxu0
    %352 = vmatprep.mubr.bf16.mxu0 0
    %353 = vmatmul.mubr.bf16.gmra.mxu0 %v194
    %v354 = vpop.f32.mrf.mxu0
    %v355 = vadd.f32 %v56, %v354
    %v356 = vpop.f32.mrf.mxu0
    %v357 = vpop.f32.mrf.mxu0
    %v358 = vadd.f32 %v56, %v357
    %v359 = vpop.f32.mrf.mxu0
    %360 = vdwg.mxu0
    %v361 = vmax.f32 %v235, 0.0
    %v362 = vmax.f32 %v238, 0.0
    %v363 = vmax.f32 %v243, 0.0
    %v364 = vmax.f32 %v246, 0.0
    %v365 = vmax.f32 %v251, 0.0
    %v366 = vmax.f32 %v254, 0.0
    %v367 = vmax.f32 %v259, 0.0
    %v368 = vmax.f32 %v262, 0.0
    %v369 = vmax.f32 %v267, 0.0
    %v370 = vmax.f32 %v270, 0.0
    %v371 = vmax.f32 %v275, 0.0
    %v372 = vmax.f32 %v278, 0.0
    %v373 = vmax.f32 %v283, 0.0
    %v374 = vmax.f32 %v286, 0.0
    %v375 = vmax.f32 %v291, 0.0
    %v376 = vmax.f32 %v294, 0.0
    %v377 = vmax.f32 %v299, 0.0
    %v378 = vmax.f32 %v302, 0.0
    %v379 = vmax.f32 %v307, 0.0
    %v380 = vmax.f32 %v310, 0.0
    %v381 = vmax.f32 %v315, 0.0
    %v382 = vmax.f32 %v318, 0.0
    %v383 = vmax.f32 %v323, 0.0
    %v384 = vmax.f32 %v326, 0.0
    %v385 = vmax.f32 %v331, 0.0
    %v386 = vmax.f32 %v334, 0.0
    %v387 = vmax.f32 %v339, 0.0
    %v388 = vmax.f32 %v342, 0.0
    %v389 = vmax.f32 %v347, 0.0
    %v390 = vmax.f32 %v350, 0.0
    %v391 = vmax.f32 %v355, 0.0
    %v392 = vmax.f32 %v358, 0.0
    %v393 = vpack.c.bf16 %v362, %v361
    %v394 = vpack.c.bf16 %v364, %v363
    %v395 = vpack.c.bf16 %v366, %v365
    %v396 = vpack.c.bf16 %v368, %v367
    %v397 = vpack.c.bf16 %v370, %v369
    %v398 = vpack.c.bf16 %v372, %v371
    %v399 = vpack.c.bf16 %v374, %v373
    %v400 = vpack.c.bf16 %v376, %v375
    %v401 = vpack.c.bf16 %v378, %v377
    %v402 = vpack.c.bf16 %v380, %v379
    %v403 = vpack.c.bf16 %v382, %v381
    %v404 = vpack.c.bf16 %v384, %v383
    %v405 = vpack.c.bf16 %v386, %v385
    %v406 = vpack.c.bf16 %v388, %v387
    %v407 = vpack.c.bf16 %v390, %v389
    %v408 = vpack.c.bf16 %v392, %v391
    %v425 = vunpack.c.l.b16 %v393
    %v426 = vunpack.c.h.b16 %v393
    %v427 = vunpack.c.l.b16 %v394
    %v428 = vunpack.c.h.b16 %v394
    %v429 = vunpack.c.l.b16 %v395
    %v430 = vunpack.c.h.b16 %v395
    %v431 = vunpack.c.l.b16 %v396
    %v432 = vunpack.c.h.b16 %v396
    %v433 = vunpack.c.l.b16 %v397
    %v434 = vunpack.c.h.b16 %v397
    %v435 = vunpack.c.l.b16 %v398
    %v436 = vunpack.c.h.b16 %v398
    %v437 = vunpack.c.l.b16 %v399
    %v438 = vunpack.c.h.b16 %v399
    %v439 = vunpack.c.l.b16 %v400
    %v440 = vunpack.c.h.b16 %v400
    %v441 = vunpack.c.l.b16 %v401
    %v442 = vunpack.c.h.b16 %v401
    %v443 = vunpack.c.l.b16 %v402
    %v444 = vunpack.c.h.b16 %v402
    %v445 = vunpack.c.l.b16 %v403
    %v446 = vunpack.c.h.b16 %v403
    %v447 = vunpack.c.l.b16 %v404
    %v448 = vunpack.c.h.b16 %v404
    %v449 = vunpack.c.l.b16 %v405
    %v450 = vunpack.c.h.b16 %v405
    %v451 = vunpack.c.l.b16 %v406
    %v452 = vunpack.c.h.b16 %v406
    %v453 = vunpack.c.l.b16 %v407
    %v454 = vunpack.c.h.b16 %v407
    %v455 = vunpack.c.l.b16 %v408
    %v456 = vunpack.c.h.b16 %v408
    %v457 = vpack.c.b16 %v425, %v425
    %v458 = vpack.c.b16 %v426, %v426
    %v459 = vpack.c.b16 %v427, %v427
    %v460 = vpack.c.b16 %v428, %v428
    %v461 = vpack.c.b16 %v429, %v429
    %v462 = vpack.c.b16 %v430, %v430
    %v463 = vpack.c.b16 %v431, %v431
    %v464 = vpack.c.b16 %v432, %v432
    %v465 = vpack.c.b16 %v433, %v433
    %v466 = vpack.c.b16 %v434, %v434
    %v467 = vpack.c.b16 %v435, %v435
    %v468 = vpack.c.b16 %v436, %v436
    %v469 = vpack.c.b16 %v437, %v437
    %v470 = vpack.c.b16 %v438, %v438
    %v471 = vpack.c.b16 %v439, %v439
    %v472 = vpack.c.b16 %v440, %v440
    %v473 = vpack.c.b16 %v441, %v441
    %v474 = vpack.c.b16 %v442, %v442
    %v475 = vpack.c.b16 %v443, %v443
    %v476 = vpack.c.b16 %v444, %v444
    %v477 = vpack.c.b16 %v445, %v445
    %v478 = vpack.c.b16 %v446, %v446
    %v479 = vpack.c.b16 %v447, %v447
    %v480 = vpack.c.b16 %v448, %v448
    %v481 = vpack.c.b16 %v449, %v449
    %v482 = vpack.c.b16 %v450, %v450
    %v483 = vpack.c.b16 %v451, %v451
    %v484 = vpack.c.b16 %v452, %v452
    %v485 = vpack.c.b16 %v453, %v453
    %v486 = vpack.c.b16 %v454, %v454
    %v487 = vpack.c.b16 %v455, %v455
    %v488 = vpack.c.b16 %v456, %v456
    %521 = vst [vmem:[#allocation2] sm:$0xf] %v457
    %522 = vst [vmem:[#allocation2 + $0x4] sm:$0xf] %v458
    %523 = vst [vmem:[#allocation2 + $0x8] sm:$0xf] %v459
    %524 = vst [vmem:[#allocation2 + $0xc] sm:$0xf] %v460
    %525 = vst [vmem:[#allocation2 + $0x10] sm:$0xf] %v461
    %526 = vst [vmem:[#allocation2 + $0x14] sm:$0xf] %v462
    %527 = vst [vmem:[#allocation2 + $0x18] sm:$0xf] %v463
    %528 = vst [vmem:[#allocation2 + $0x1c] sm:$0xf] %v464
    %529 = vst [vmem:[#allocation2 + $0x20] sm:$0xf] %v465
    %530 = vst [vmem:[#allocation2 + $0x24] sm:$0xf] %v466
    %531 = vst [vmem:[#allocation2 + $0x28] sm:$0xf] %v467
    %532 = vst [vmem:[#allocation2 + $0x2c] sm:$0xf] %v468
    %533 = vst [vmem:[#allocation2 + $0x30] sm:$0xf] %v469
    %534 = vst [vmem:[#allocation2 + $0x34] sm:$0xf] %v470
    %535 = vst [vmem:[#allocation2 + $0x38] sm:$0xf] %v471
    %536 = vst [vmem:[#allocation2 + $0x3c] sm:$0xf] %v472
    %537 = vst [vmem:[#allocation2 + $0x40] sm:$0xf] %v473
    %538 = vst [vmem:[#allocation2 + $0x44] sm:$0xf] %v474
    %539 = vst [vmem:[#allocation2 + $0x48] sm:$0xf] %v475
    %540 = vst [vmem:[#allocation2 + $0x4c] sm:$0xf] %v476
    %541 = vst [vmem:[#allocation2 + $0x50] sm:$0xf] %v477
    %542 = vst [vmem:[#allocation2 + $0x54] sm:$0xf] %v478
    %543 = vst [vmem:[#allocation2 + $0x58] sm:$0xf] %v479
    %544 = vst [vmem:[#allocation2 + $0x5c] sm:$0xf] %v480
    %545 = vst [vmem:[#allocation2 + $0x60] sm:$0xf] %v481
    %546 = vst [vmem:[#allocation2 + $0x64] sm:$0xf] %v482
    %547 = vst [vmem:[#allocation2 + $0x68] sm:$0xf] %v483
    %548 = vst [vmem:[#allocation2 + $0x6c] sm:$0xf] %v484
    %549 = vst [vmem:[#allocation2 + $0x70] sm:$0xf] %v485
    %550 = vst [vmem:[#allocation2 + $0x74] sm:$0xf] %v486
    %551 = vst [vmem:[#allocation2 + $0x78] sm:$0xf] %v487
    %552 = vst [vmem:[#allocation2 + $0x7c] sm:$0xf] %v488
    // Predicated region
    $region14: #{tpu_custom_call.1} parent=1 // pred_check
      _
    $region15: #{tpu_custom_call.1} parent=1 // pred_check_branch
      %554 = sbr.rel (0) target = $region17
    $region16: #{tpu_custom_call.1} parent=1 // pred_region
      %s556 = ssub.s32 2048, 2048
      %557 = vsyncadd [#allocation3], %s556
      %s558 = sshll.u32 [#allocation2], 4
      %s559 = int_to_ptr.vmem [resolvable:$true] %s558
      %564 = dma.vmem_to_hbm [thread:$0]  %s559, 2048, %s3, [#allocation3], 64, 64, 4
    $region17: #{tpu_custom_call.1} parent=1 // pred_fallthru
      _
    // Predicated region
    $region18: #{tpu_custom_call.1} parent=1 // pred_check
      _
    $region19: #{tpu_custom_call.1} parent=1 // pred_check_branch
      %566 = sbr.rel (0) target = $region21
    $region20: #{tpu_custom_call.1} parent=1 // pred_region
      %567 = dma.done [#allocation3], 2048
    $region21: #{tpu_custom_call.1} parent=1 // pred_fallthru
      _
    %568 = vsyncpa [#allocation3], 1

</llo_original>
